<compile_context>
chip_gen: v7x
topology: tpu7x:2x2x1
jax: 0.10.0
libtpu: 0.0.40
codegen_flags: <defaults>
</compile_context>

<pallas_src>
import math

import jax
import jax.numpy as jnp
from jax.experimental import pallas as pl
from jax.experimental.pallas import tpu as pltpu

_NORM_EPS = 1e-30


# ----------------------------------------------------------------------------
# Phase 1: per-row margin parameters + t EMA (runs once, no grid)
# ----------------------------------------------------------------------------
def make_phase1_kernel(m: float):
    cos_m = math.cos(m)
    sin_m = math.sin(m)
    threshold = math.cos(math.pi - m)
    mm = math.sin(math.pi - m) * m

    def kernel(emb_ref, wl_ref, t_ref, emb_n_ref, ctm_ref, ft_ref, t_new_ref):
        emb = emb_ref[...].astype(jnp.float32)        # (B, D)
        wl = wl_ref[...].astype(jnp.float32)          # (D, P), P = B padded to 128

        # multiply-by-rsqrt instead of divide-by-sqrt (EUP slot)
        emb_n = emb * jax.lax.rsqrt(
            jnp.maximum(jnp.sum(emb * emb, axis=1, keepdims=True), _NORM_EPS))

        # post-matmul column normalization (same scheme as phase 2)
        inv_wl = jax.lax.rsqrt(
            jnp.maximum(jnp.sum(wl * wl, axis=0, keepdims=True), _NORM_EPS))
        cos_bb = jnp.dot(emb_n, wl, preferred_element_type=jnp.float32) * inv_wl
        cos_bb = jnp.clip(cos_bb, -1.0, 1.0)          # (B, P)

        # target_logit[b] = diag of the small matmul
        r = jax.lax.broadcasted_iota(jnp.int32, cos_bb.shape, 0)
        c = jax.lax.broadcasted_iota(jnp.int32, cos_bb.shape, 1)
        target = jnp.sum(jnp.where(r == c, cos_bb, 0.0), axis=1, keepdims=True)

        sin_theta = jnp.sqrt(jnp.maximum(1.0 - target * target, 0.0))
        cos_theta_m = target * cos_m - sin_theta * sin_m
        final_target = jnp.where(target > threshold, cos_theta_m, target - mm)

        # EMA update of `t` (done once, before the hard reweighting)
        t_new = jnp.mean(target) * 0.01 + 0.99 * t_ref[0, 0]

        emb_n_ref[...] = emb_n.astype(emb_n_ref.dtype)   # bf16 when streaming bf16
        ctm_ref[...] = cos_theta_m
        ft_ref[...] = final_target
        t_new_ref[0, 0] = t_new

    return kernel


# ----------------------------------------------------------------------------
# Phase 2: C-tiled logits (grid over class tiles, "parallel")
# ----------------------------------------------------------------------------
def make_phase2_kernel(s: float, tile_c: int):
    def kernel(emb_n_ref, w_ref, label_ref, ctm_ref, ft_ref, t_ref, out_ref):
        j = pl.program_id(0)

        w = w_ref[...]                                 # (D, TILE_C), stream dtype
        # f32-accumulated column sum-of-squares, applied AFTER the matmul as a
        # (1, TILE_C) row scale (no full-tile w_n multiply / down-cast).
        wf = w.astype(jnp.float32)
        inv_norm = jax.lax.rsqrt(
            jnp.maximum(jnp.sum(wf * wf, axis=0, keepdims=True), _NORM_EPS))

        # MXU matmul on the streamed operands (bf16 by default), f32 accumulate.
        cos = jnp.dot(emb_n_ref[...], w, preferred_element_type=jnp.float32)
        cos = jnp.clip(cos * inv_norm, -1.0, 1.0)      # (B, TILE_C), f32

        cos_theta_m = ctm_ref[...]                     # (B, 1) f32
        t_new = t_ref[0, 0]                            # scalar from SMEM

        hard = cos * (t_new + cos)                     # all margin math stays f32
        out = jnp.where(cos > cos_theta_m, hard, cos)

        # scatter_ of final_target into the label column (tile-offset iota);
        # out-of-range columns of the ragged last tile never match a label.
        col = jax.lax.broadcasted_iota(jnp.int32, cos.shape, 1) + j * tile_c
        out = jnp.where(col == label_ref[...], ft_ref[...], out)

        out_ref[...] = (out * s).astype(out_ref.dtype)

    return kernel


# ----------------------------------------------------------------------------
# Generation-aware tile / VMEM planning
# ----------------------------------------------------------------------------
def _vmem_capacity_bytes() -> int:
    try:
        return int(pltpu.get_tpu_info().vmem_capacity_bytes)
    except Exception:
        return 64 * 1024 * 1024          # assume the smallest per-core VMEM (v7x)


def _phase2_footprint(B, D, tile_c, es_w, es_out) -> int:
    return (2 * D * tile_c * es_w        # double-buffered weight tiles
            + 2 * B * tile_c * es_out    # double-buffered output tiles
            + D * tile_c * 4             # f32 temp for the column sum-of-squares
            + 6 * B * tile_c * 4         # elementwise temps (cos/iota/onehot/...)
            + 2 * B * D * es_w           # resident normalized embeddings
            + (4 << 20))                 # headroom (labels/ctm/ft/scalars/spill)


def _plan_phase2(B, D, C, es_w, es_out, tile_c):
    cap = _vmem_capacity_bytes()
    c_up = pl.cdiv(C, 128) * 128
    if tile_c is None:
        # Largest lane-multiple tile whose double-buffered footprint stays under
        # ~45% of this generation's VMEM (128 MiB v5e/v6e -> big tiles,
        # 64 MiB/core v7x -> capped).
        budget = int(cap * 0.45)
        per_col = 2 * D * es_w + 2 * B * es_out + D * 4 + 6 * B * 4
        fixed = 2 * B * D * es_w + (4 << 20)
        tile_c = (budget - fixed) // max(per_col, 1)
    tile_c = max(128, min(int(tile_c), 8192))
    tile_c = (tile_c // 128) * 128
    tile_c = min(tile_c, c_up)
    vmem_limit = _phase2_footprint(B, D, tile_c, es_w, es_out)
    vmem_limit = max(16 << 20, min(vmem_limit, int(cap * 0.9)))
    return tile_c, vmem_limit


# ----------------------------------------------------------------------------
# Forward wrapper (training path)
# ----------------------------------------------------------------------------
def curricular_face_forward(embeddings, weight, label, t, *, s=64.0, m=0.5,
                            tile_c=None, use_bf16_matmul=True,
                            out_dtype=jnp.float32):
    """Training-mode CurricularFace forward. Returns (logits, new_t)."""
    # TODO(synk): inference path (label is None) just returns s * cos_theta; not wired here.
    B, D = embeddings.shape
    D2, C = weight.shape
    assert D == D2

    # MXU operand / weight-stream dtype. NOTE: for peak perf hold W persistently
    # in this dtype in HBM (cast at parameter-update time); this per-call cast is
    # only a fallback.
    stream_dtype = jnp.bfloat16 if use_bf16_matmul else jnp.float32
    w_stream = weight if weight.dtype == stream_dtype else weight.astype(stream_dtype)
    es_w = 2 if use_bf16_matmul else 4
    es_out = 2 if out_dtype == jnp.bfloat16 else 4

    label = jnp.asarray(label, jnp.int32).reshape(B)
    label2d = label.reshape(B, 1)
    t2d = jnp.asarray(t, jnp.float32).reshape(1, 1)

    # ---------------- phase 1: gather label columns + per-row params ----------
    w_lbl = jnp.take(w_stream, label, axis=1)            # (D, B) tiny XLA gather
    pad_cols = (-B) % 128                                 # lane-dense phase-1 matmul
    if pad_cols:
        w_lbl = jnp.pad(w_lbl, ((0, 0), (0, pad_cols)), constant_values=1.0)

    emb_n, ctm, ft, t_new = pl.pallas_call(
        make_phase1_kernel(m),
        out_shape=(
            jax.ShapeDtypeStruct((B, D), stream_dtype),   # normalized embeddings
            jax.ShapeDtypeStruct((B, 1), jnp.float32),    # cos_theta_m per row
            jax.ShapeDtypeStruct((B, 1), jnp.float32),    # final_target per row
            jax.ShapeDtypeStruct((1, 1), jnp.float32),    # updated t
        ),
        in_specs=[
            pl.BlockSpec(memory_space=pltpu.MemorySpace.VMEM),    # embeddings
            pl.BlockSpec(memory_space=pltpu.MemorySpace.VMEM),    # gathered W cols
            pl.BlockSpec(memory_space=pltpu.MemorySpace.SMEM),    # t
        ],
        out_specs=(
            pl.BlockSpec(memory_space=pltpu.MemorySpace.VMEM),
            pl.BlockSpec(memory_space=pltpu.MemorySpace.VMEM),
            pl.BlockSpec(memory_space=pltpu.MemorySpace.VMEM),
            pl.BlockSpec(memory_space=pltpu.MemorySpace.SMEM),
        ),
    )(embeddings, w_lbl, t2d)

    # ---------------- phase 2: C-tiled logits ---------------------------------
    tile_c, vmem_limit = _plan_phase2(B, D, C, es_w, es_out, tile_c)
    grid = (pl.cdiv(C, tile_c),)          # ragged last tile -> Pallas bounds masking

    cost = pl.CostEstimate(
        flops=2 * B * D * C,
        transcendentals=C,                                # one rsqrt per column
        bytes_accessed=D * C * es_w + B * C * es_out + B * D * es_w,
    )

    out = pl.pallas_call(
        make_phase2_kernel(s, tile_c),
        out_shape=jax.ShapeDtypeStruct((B, C), out_dtype),
        grid=grid,
        in_specs=[
            pl.BlockSpec((B, D), lambda j: (0, 0)),                # emb_n (resident)
            pl.BlockSpec((D, tile_c), lambda j: (0, j)),           # streamed W tile
            pl.BlockSpec((B, 1), lambda j: (0, 0)),                # labels
            pl.BlockSpec((B, 1), lambda j: (0, 0)),                # cos_theta_m
            pl.BlockSpec((B, 1), lambda j: (0, 0)),                # final_target
            pl.BlockSpec(memory_space=pltpu.MemorySpace.SMEM),     # t_new scalar
        ],
        out_specs=pl.BlockSpec((B, tile_c), lambda j: (0, j)),
        compiler_params=pltpu.CompilerParams(
            dimension_semantics=("parallel",),   # independent class tiles; lets
                                                 # v7x's two TCs split the stream
            vmem_limit_bytes=vmem_limit,
        ),
        cost_estimate=cost,
    )(emb_n, w_stream, label2d, ctm, ft, t_new)

    return out, t_new.reshape(())


# ----------------------------------------------------------------------------
# Plain-JAX reference mirroring the PyTorch forward (training mode, f32)
# ----------------------------------------------------------------------------
def curricular_face_reference(embeddings, weight, label, t, *, s=64.0, m=0.5):
    """Returns (output, t_new, cos_theta, cos_theta_m); the extra internals are
    used by the self-test to exclude mask-boundary elements."""
    cos_m, sin_m = math.cos(m), math.sin(m)
    threshold = math.cos(math.pi - m)
    mm = math.sin(math.pi - m) * m

    emb_n = embeddings / jnp.linalg.norm(embeddings, axis=1, keepdims=True)
    w_n = weight / jnp.linalg.norm(weight, axis=0, keepdims=True)
    cos = jnp.matmul(emb_n, w_n, precision=jax.lax.Precision.HIGHEST)
    cos = jnp.clip(cos, -1.0, 1.0).astype(jnp.float32)
    B = embeddings.shape[0]
    target = cos[jnp.arange(B), label][:, None]
    sin_theta = jnp.sqrt(1.0 - target ** 2)
    cos_theta_m = target * cos_m - sin_theta * sin_m
    mask = cos > cos_theta_m
    final_target = jnp.where(target > threshold, cos_theta_m, target - mm)
    t_new = jnp.mean(target) * 0.01 + 0.99 * t
    out = jnp.where(mask, cos * (t_new + cos), cos)
    onehot = label[:, None] == jnp.arange(cos.shape[1])[None, :]
    out = jnp.where(onehot, final_target, out)
    return out * s, t_new, cos, cos_theta_m


def _check(out, t_new, ref, *, atol, boundary, t_atol):
    ref_out, ref_t, ref_cos, ref_ctm = ref
    # Elements where cos is within `boundary` of the hard/easy threshold may
    # legitimately take the other branch under a lower-precision matmul.
    near = jnp.abs(ref_cos - ref_ctm) < boundary
    ok = jnp.isclose(out, ref_out, atol=atol, rtol=0.0) | near
    assert bool(jnp.all(ok)), "logits mismatch"
    assert float(jnp.mean(near.astype(jnp.float32))) < 0.02, "boundary set too large"
    assert bool(jnp.allclose(t_new, ref_t, atol=t_atol)), "t buffer mismatch"


if __name__ == "__main__":
    # Small shapes consistent with the module: in_features=32, batch=8,
    # out_features=500 (deliberately not a multiple of 128) to exercise both the
    # multi-tile grid and the ragged last tile.
    B, D, C = 8, 32, 500
    s_val, m_val = 64.0, 0.5

    key = jax.random.PRNGKey(0)
    k_emb, k_w, k_lbl = jax.random.split(key, 3)
    embeddings = jax.random.normal(k_emb, (B, D), dtype=jnp.float32)
    weight = 0.01 * jax.random.normal(k_w, (D, C), dtype=jnp.float32)  # init std=0.01
    label = jax.random.randint(k_lbl, (B,), 0, C, dtype=jnp.int32)
    t0 = jnp.zeros((), jnp.float32)       # register_buffer('t', torch.zeros(1))

    ref = curricular_face_reference(embeddings, weight, label, t0, s=s_val, m=m_val)

    # 1) f32 weight stream with a forced small tile -> multi-tile grid + ragged tail.
    out32, t32 = curricular_face_forward(embeddings, weight, label, t0,
                                         s=s_val, m=m_val, tile_c=128,
                                         use_bf16_matmul=False)
    jax.block_until_ready(out32)
    assert out32.shape == (B, C), "output shape mismatch"
    _check(out32, t32, ref, atol=2e-1, boundary=5e-3, t_atol=1e-4)

    # 2) Default perf path: bf16 weight stream + generation-aware auto tiling.
    out_bf, t_bf = curricular_face_forward(embeddings, weight, label, t0,
                                           s=s_val, m=m_val)
    jax.block_until_ready(out_bf)
    assert out_bf.shape == (B, C), "output shape mismatch"
    _check(out_bf, t_bf, ref, atol=5e-1, boundary=1e-2, t_atol=1e-4)

    print("KERNEL_OK")
</pallas_src>

<mosaic_0001>
module attributes {stable_mosaic.version = 11 : i64} {
  func.func @kernel(%arg0: memref<8x32xf32, #tpu.memory_space<vmem>>, %arg1: memref<32x128xf32, #tpu.memory_space<vmem>>, %arg2: memref<1x1xf32, #tpu.memory_space<smem>>, %arg3: memref<8x32xf32, #tpu.memory_space<vmem>>, %arg4: memref<8x1xf32, #tpu.memory_space<vmem>>, %arg5: memref<8x1xf32, #tpu.memory_space<vmem>>, %arg6: memref<1x1xf32, #tpu.memory_space<smem>>) attributes {dimension_semantics = [], scalar_prefetch = 0 : i64, scratch_operands = 0 : i64, tpu.core_type = #tpu.core_type<tc>} {
    %c0 = arith.constant 0 : index
    %c0_0 = arith.constant 0 : index
    %0 = vector.load %arg0[%c0, %c0_0] : memref<8x32xf32, #tpu.memory_space<vmem>>, vector<8x32xf32>
    %c0_1 = arith.constant 0 : index
    %c0_2 = arith.constant 0 : index
    %1 = vector.load %arg1[%c0_1, %c0_2] : memref<32x128xf32, #tpu.memory_space<vmem>>, vector<32x128xf32>
    %2 = arith.mulf %0, %0 : vector<8x32xf32>
    %cst = arith.constant dense<0.000000e+00> : vector<8xf32>
    %3 = vector.multi_reduction <add>, %2, %cst [1] : vector<8x32xf32> to vector<8xf32>
    %4 = vector.shape_cast %3 : vector<8xf32> to vector<8x1xf32>
    %cst_3 = arith.constant 1.000000e-30 : f32
    %5 = vector.broadcast %cst_3 : f32 to vector<8x1xf32>
    %6 = arith.maximumf %4, %5 : vector<8x1xf32>
    %7 = math.rsqrt %6 : vector<8x1xf32>
    %8 = vector.broadcast %7 : vector<8x1xf32> to vector<8x32xf32>
    %9 = arith.mulf %0, %8 : vector<8x32xf32>
    %10 = arith.mulf %1, %1 : vector<32x128xf32>
    %cst_4 = arith.constant dense<0.000000e+00> : vector<128xf32>
    %11 = vector.multi_reduction <add>, %10, %cst_4 [0] : vector<32x128xf32> to vector<128xf32>
    %12 = vector.shape_cast %11 : vector<128xf32> to vector<1x128xf32>
    %cst_5 = arith.constant 1.000000e-30 : f32
    %13 = vector.broadcast %cst_5 : f32 to vector<1x128xf32>
    %14 = arith.maximumf %12, %13 : vector<1x128xf32>
    %15 = math.rsqrt %14 : vector<1x128xf32>
    %cst_6 = arith.constant dense<0.000000e+00> : vector<8x128xf32>
    %16 = tpu.matmul %9, %1, %cst_6 {dimension_numbers = #tpu.dot_dimension_numbers<[1], [0], [0], [1], [0, 0, 1, 1], [], []>} : vector<8x32xf32>, vector<32x128xf32>, vector<8x128xf32> -> vector<8x128xf32>
    %17 = vector.broadcast %15 : vector<1x128xf32> to vector<8x128xf32>
    %18 = arith.mulf %16, %17 : vector<8x128xf32>
    %cst_7 = arith.constant -1.000000e+00 : f32
    %cst_8 = arith.constant 1.000000e+00 : f32
    %19 = vector.broadcast %cst_7 : f32 to vector<8x128xf32>
    %20 = arith.maximumf %19, %18 : vector<8x128xf32>
    %21 = vector.broadcast %cst_8 : f32 to vector<8x128xf32>
    %22 = arith.minimumf %21, %20 : vector<8x128xf32>
    %23 = tpu.iota {dimensions = array<i32: 0>} : vector<8x128xi32>
    %24 = tpu.iota {dimensions = array<i32: 1>} : vector<8x128xi32>
    %25 = arith.cmpi eq, %23, %24 : vector<8x128xi32>
    %cst_9 = arith.constant 0.000000e+00 : f32
    %26 = vector.broadcast %cst_9 : f32 to vector<8x128xf32>
    %27 = arith.select %25, %22, %26 : vector<8x128xi1>, vector<8x128xf32>
    %cst_10 = arith.constant dense<0.000000e+00> : vector<8xf32>
    %28 = vector.multi_reduction <add>, %27, %cst_10 [1] : vector<8x128xf32> to vector<8xf32>
    %29 = vector.shape_cast %28 : vector<8xf32> to vector<8x1xf32>
    %30 = arith.mulf %29, %29 : vector<8x1xf32>
    %cst_11 = arith.constant 1.000000e+00 : f32
    %31 = vector.broadcast %cst_11 : f32 to vector<8x1xf32>
    %32 = arith.subf %31, %30 : vector<8x1xf32>
    %cst_12 = arith.constant 0.000000e+00 : f32
    %33 = vector.broadcast %cst_12 : f32 to vector<8x1xf32>
    %34 = arith.maximumf %32, %33 : vector<8x1xf32>
    %35 = math.sqrt %34 : vector<8x1xf32>
    %cst_13 = arith.constant 0.87758255 : f32
    %36 = vector.broadcast %cst_13 : f32 to vector<8x1xf32>
    %37 = arith.mulf %29, %36 : vector<8x1xf32>
    %cst_14 = arith.constant 0.47942555 : f32
    %38 = vector.broadcast %cst_14 : f32 to vector<8x1xf32>
    %39 = arith.mulf %35, %38 : vector<8x1xf32>
    %40 = arith.subf %37, %39 : vector<8x1xf32>
    %cst_15 = arith.constant -0.87758255 : f32
    %41 = vector.broadcast %cst_15 : f32 to vector<8x1xf32>
    %42 = arith.cmpf ogt, %29, %41 : vector<8x1xf32>
    %cst_16 = arith.constant 0.239712775 : f32
    %43 = vector.broadcast %cst_16 : f32 to vector<8x1xf32>
    %44 = arith.subf %29, %43 : vector<8x1xf32>
    %45 = arith.select %42, %40, %44 : vector<8x1xi1>, vector<8x1xf32>
    %46 = vector.shape_cast %29 : vector<8x1xf32> to vector<1x8x1xf32>
    %cst_17 = arith.constant dense<0.000000e+00> : vector<1xf32>
    %47 = vector.multi_reduction <add>, %46, %cst_17 [1, 2] : vector<1x8x1xf32> to vector<1xf32>
    %48 = vector.shape_cast %47 : vector<1xf32> to vector<1x1x1xf32>
    %49 = vector.extract %48[0, 0, 0] : f32 from vector<1x1x1xf32>
    %cst_18 = arith.constant 8.000000e+00 : f32
    %50 = arith.divf %49, %cst_18 : f32
    %cst_19 = arith.constant 0.00999999977 : f32
    %51 = arith.mulf %50, %cst_19 : f32
    %c0_20 = arith.constant 0 : index
    %c0_21 = arith.constant 0 : index
    %52 = memref.load %arg2[%c0_20, %c0_21] : memref<1x1xf32, #tpu.memory_space<smem>>
    %cst_22 = arith.constant 9.900000e-01 : f32
    %53 = arith.mulf %cst_22, %52 : f32
    %54 = arith.addf %51, %53 : f32
    %c0_23 = arith.constant 0 : index
    %c0_24 = arith.constant 0 : index
    %55 = vector.load %arg3[%c0_23, %c0_24] : memref<8x32xf32, #tpu.memory_space<vmem>>, vector<8x32xf32>
    tpu.vector_store %arg3[%c0_23, %c0_24], %9 {strides = array<i32>} : memref<8x32xf32, #tpu.memory_space<vmem>>, vector<8x32xf32>,
    %c0_25 = arith.constant 0 : index
    %c0_26 = arith.constant 0 : index
    %56 = vector.load %arg4[%c0_25, %c0_26] : memref<8x1xf32, #tpu.memory_space<vmem>>, vector<8x1xf32>
    tpu.vector_store %arg4[%c0_25, %c0_26], %40 {strides = array<i32>} : memref<8x1xf32, #tpu.memory_space<vmem>>, vector<8x1xf32>,
    %c0_27 = arith.constant 0 : index
    %c0_28 = arith.constant 0 : index
    %57 = vector.load %arg5[%c0_27, %c0_28] : memref<8x1xf32, #tpu.memory_space<vmem>>, vector<8x1xf32>
    tpu.vector_store %arg5[%c0_27, %c0_28], %45 {strides = array<i32>} : memref<8x1xf32, #tpu.memory_space<vmem>>, vector<8x1xf32>,
    %c0_29 = arith.constant 0 : index
    %c0_30 = arith.constant 0 : index
    %58 = memref.load %arg6[%c0_29, %c0_30] : memref<1x1xf32, #tpu.memory_space<smem>>
    memref.store %54, %arg6[%c0_29, %c0_30] : memref<1x1xf32, #tpu.memory_space<smem>>
    return
  }
}

</mosaic_0001>

<llo_original>
// kernel: tpu_custom_call.1
$region0: #{tpu_custom_call.1}
  #allocation0 [shape = 'u32[]', space=smem, size = 0x4, offset = 0x4, fixed_abs, tag = 'smem constant byte address 0x4 - core index']
  #allocation1 [shape = 'u32[144,128]{1,0:T(1,128)}', space=vmem, size = 0x12000, scoped, tag = 'internal scratch']
  #allocation2 [shape = 'f32[1,1]{1,0:T(1,128)S(6)}', space=smem, size = 0x200, scoped, tag = 'scoped memory for tpu_custom_call.1']
  %s0 = inlined_call_operand.hbm [shape: f32[8,32], index: 0, kind: input, shape index: {}]
  %s1 = inlined_call_operand.hbm [shape: f32[32,128], index: 1, kind: input, shape index: {}]
  %s2 = inlined_call_operand.<no memory space> [shape: f32[1,1], index: 2, kind: input, shape index: {}]
  %s3 = inlined_call_operand.hbm [shape: f32[8,32], index: 3, kind: output, shape index: {0}]
  %s4 = inlined_call_operand.vmem [shape: f32[8,1], index: 4, kind: output, shape index: {1}]
  %s5 = inlined_call_operand.vmem [shape: f32[8,1], index: 5, kind: output, shape index: {2}]
  %s6 = inlined_call_operand.hbm [shape: f32[1,1], index: 6, kind: output, shape index: {3}]
  %7 = xla_tuple %s3, %s4, %s5, %s6
  %s8 = sld [smem:[#allocation0]]
  $region54: #{tpu_custom_call.1} parent=0
    _
  %s10 = ssub.s32 1, %s8
  %s11 = scalar_select 0, %s10, %s8
  %12 = sst [smem:[#allocation2]] %s2
  $region1: #{tpu_custom_call.1} parent=0
    #allocation3 [shape = 'u8[4096]{0}', space=vmem, size = 0x1000, scoped, tag = 'input window, operand 0, single buffered']
    #allocation4 [shape = 's32[1]{0}', space=sflag, size = 0x4, scoped, tag = 'scoped memory for tpu_custom_call.1']
    #allocation5 [shape = 's32[1]{0}', space=sflag, size = 0x4, scoped, tag = 'scoped memory for tpu_custom_call.1']
    #allocation6 [shape = 's32[1]{0}', space=sflag, size = 0x4, scoped, tag = 'scoped memory for tpu_custom_call.1']
    #allocation7 [shape = 'u8[16384]{0}', space=vmem, size = 0x4000, scoped, tag = 'input window, operand 1, single buffered']
    #allocation8 [shape = 's32[1]{0}', space=sflag, size = 0x4, scoped, tag = 'scoped memory for tpu_custom_call.1']
    #allocation9 [shape = 'u8[4096]{0}', space=vmem, size = 0x1000, scoped, tag = 'output window, operand 0, single buffered']
    #allocation10 [shape = 'u8[512]{0}', space=smem, size = 0x200, scoped, tag = 'output window, operand 3, single buffered']
    %13 = vsyncpa [#allocation4], 0
    %14 = vsyncpa [#allocation8], 0
    %15 = vsyncpa [#allocation5], 0
    %16 = vsyncpa [#allocation6], 0
    // Predicated region
    $region2: #{tpu_custom_call.1} parent=1 // pred_check
      _
    $region3: #{tpu_custom_call.1} parent=1 // pred_check_branch
      %18 = sbr.rel (0) target = $region5
    $region4: #{tpu_custom_call.1} parent=1 // pred_region
      %s20 = ssub.s32 128, 128
      %21 = vsyncadd [#allocation4], %s20
      %s23 = sshll.u32 [#allocation3], 4
      %s24 = int_to_ptr.vmem [resolvable:$true] %s23
      %26 = dma.hbm_to_vmem [thread:$0]  %s0, 128, %s24, [#allocation4]
    $region5: #{tpu_custom_call.1} parent=1 // pred_fallthru
      _
    // Predicated region
    $region6: #{tpu_custom_call.1} parent=1 // pred_check
      _
    $region7: #{tpu_custom_call.1} parent=1 // pred_check_branch
      %28 = sbr.rel (0) target = $region9
    $region8: #{tpu_custom_call.1} parent=1 // pred_region
      %s30 = ssub.s32 512, 512
      %31 = vsyncadd [#allocation8], %s30
      %s32 = sshll.u32 [#allocation7], 4
      %s33 = int_to_ptr.vmem [resolvable:$true] %s32
      %38 = dma.hbm_to_vmem [thread:$0]  %s1, 512, %s33, [#allocation8], 128, 128, 8
    $region9: #{tpu_custom_call.1} parent=1 // pred_fallthru
      _
    // Predicated region
    $region10: #{tpu_custom_call.1} parent=1 // pred_check
      _
    $region11: #{tpu_custom_call.1} parent=1 // pred_check_branch
      %40 = sbr.rel (0) target = $region13
    $region12: #{tpu_custom_call.1} parent=1 // pred_region
      _
    $region13: #{tpu_custom_call.1} parent=1 // pred_fallthru
      _
    // Predicated region
    $region14: #{tpu_custom_call.1} parent=1 // pred_check
      _
    $region15: #{tpu_custom_call.1} parent=1 // pred_check_branch
      %42 = sbr.rel (0) target = $region17
    $region16: #{tpu_custom_call.1} parent=1 // pred_region
      %43 = dma.done [#allocation4], 128
    $region17: #{tpu_custom_call.1} parent=1 // pred_fallthru
      _
    // Predicated region
    $region18: #{tpu_custom_call.1} parent=1 // pred_check
      _
    $region19: #{tpu_custom_call.1} parent=1 // pred_check_branch
      %45 = sbr.rel (0) target = $region21
    $region20: #{tpu_custom_call.1} parent=1 // pred_region
      %46 = dma.done [#allocation8], 512
    $region21: #{tpu_custom_call.1} parent=1 // pred_fallthru
      _
    %v47 = vld [vmem:[#allocation3] sm:$0xff]
    %v48 = vld [vmem:[#allocation7] sm:$0xff]
    %v49 = vld [vmem:[#allocation7 + $0x8] sm:$0xff]
    %v50 = vld [vmem:[#allocation7 + $0x10] sm:$0xff]
    %v51 = vld [vmem:[#allocation7 + $0x18] sm:$0xff]
    %v52 = vmul.f32 %v47, %v47
    %vm53 = vcmask 261120
    %v54 = vsel %vm53, %v52, 0.0
    %55 = vadd.xlane.f32.xlu0 %v54
    %v56 = vpop.xlane.xlu0 %55
    %v57 = vmax.f32 %v56, 1e-30
    %v58 = vrsqrt.pop %v57
    %v59 = vmul.f32 %v47, %v58
    %v60 = vmul.f32 %v48, %v48
    %v61 = vmul.f32 %v49, %v49
    %v62 = vmul.f32 %v50, %v50
    %v63 = vmul.f32 %v51, %v51
    %v64 = vadd.f32 %v60, %v61
    %v65 = vadd.f32 %v64, %v62
    %v66 = vadd.f32 %v65, %v63
    %v67 = vrot.slane %v66, 4
    %v68 = vadd.f32 %v66, %v67
    %v69 = vrot.slane %v68, 2
    %v70 = vadd.f32 %v68, %v69
    %v71 = vrot.slane %v70, 1
    %v72 = vadd.f32 %v70, %v71
    %v73 = vmax.f32 %v72, 1e-30
    %v74 = vrsqrt.pop %v73
    %v76 = vsel %vm53, %v59, 0
    %78 = vmatprep.subr.mxu0 0.0
    %79 = vmatpush1.msra.mxu0 %v48
    %80 = vmatprep.subr.mxu0 0.0
    %81 = vmatpush1.msra.mxu0 %v49
    %82 = vmatprep.subr.mxu0 0.0
    %83 = vmatpush1.msra.mxu0 %v50
    %84 = vmatprep.subr.mxu0 0.0
    %85 = vmatpush1.msra.mxu0 %v51
    %86 = vmatprep.subr.mxu0 0.0
    %87 = vmatpush1.msra.mxu0 0.0
    %88 = vmatprep.subr.mxu0 0.0
    %89 = vmatpush1.msra.mxu0 0.0
    %90 = vmatprep.subr.mxu0 0.0
    %91 = vmatpush1.msra.mxu0 0.0
    %92 = vmatprep.subr.mxu0 0.0
    %93 = vmatpush1.msra.mxu0 0.0
    %94 = vmatprep.subr.mxu0 0.0
    %95 = vmatpush1.msra.mxu0 0.0
    %96 = vmatprep.subr.mxu0 0.0
    %97 = vmatpush1.msra.mxu0 0.0
    %98 = vmatprep.subr.mxu0 0.0
    %99 = vmatpush1.msra.mxu0 0.0
    %100 = vmatprep.subr.mxu0 0.0
    %101 = vmatpush1.msra.mxu0 0.0
    %102 = vmatprep.subr.mxu0 0.0
    %103 = vmatpush1.msra.mxu0 0.0
    %104 = vmatprep.subr.mxu0 0.0
    %105 = vmatpush1.msra.mxu0 0.0
    %106 = vmatprep.subr.mxu0 0.0
    %107 = vmatpush1.msra.mxu0 0.0
    %108 = vmatprep.subr.mxu0 0.0
    %109 = vmatpush1.msra.mxu0 0.0
    %110 = vmatprep.subr.mxu0 0.0
    %111 = vmatpush1.msra.mxu0 0.0
    %112 = vmatprep.subr.mxu0 0.0
    %113 = vmatpush1.msra.mxu0 0.0
    %114 = vmatprep.subr.mxu0 0.0
    %115 = vmatpush1.msra.mxu0 0.0
    %116 = vmatprep.subr.mxu0 0.0
    %117 = vmatpush1.msra.mxu0 0.0
    %118 = vmatprep.subr.mxu0 0.0
    %119 = vmatpush1.msra.mxu0 0.0
    %120 = vmatprep.subr.mxu0 0.0
    %121 = vmatpush1.msra.mxu0 0.0
    %122 = vmatprep.subr.mxu0 0.0
    %123 = vmatpush1.msra.mxu0 0.0
    %124 = vmatprep.subr.mxu0 0.0
    %125 = vmatpush1.msra.mxu0 0.0
    %126 = vmatprep.subr.mxu0 0.0
    %127 = vmatpush1.msra.mxu0 0.0
    %128 = vmatprep.subr.mxu0 0.0
    %129 = vmatpush1.msra.mxu0 0.0
    %130 = vmatprep.subr.mxu0 0.0
    %131 = vmatpush1.msra.mxu0 0.0
    %132 = vmatprep.subr.mxu0 0.0
    %133 = vmatpush1.msra.mxu0 0.0
    %134 = vmatprep.subr.mxu0 0.0
    %135 = vmatpush1.msra.mxu0 0.0
    %136 = vmatprep.subr.mxu0 0.0
    %137 = vmatpush1.msra.mxu0 0.0
    %138 = vmatprep.subr.mxu0 0.0
    %139 = vmatpush1.msra.mxu0 0.0
    %140 = vmatprep.subr.mxu0 0.0
    %141 = vmatpush1.msra.mxu0 0.0
    %142 = vmatprep.mubr.f32.mxu0 0.0
    %143 = vmatmul.mubr.f32.gmra.mrb[0].mxu0 %v76
    %v144 = vpop.f32.mrb[0].mxu0
    %v145 = vadd.f32 0.0, %v144
    %v146 = vpop.f32.mrb[0].mxu0
    %147 = vdwg.mxu0
    %v148 = vmul.f32 %v145, %v74
    %v149 = vmax.f32 %v148, -1.0
    %v150 = vmin.f32 %v149, 1.0
    %v151 = vlaneseq
    %v152 = vshrl.u32 %v151, 7
    %v153 = vlaneseq
    %v154 = vand.u32 %v153, 127
    %vm155 = vcmp.eq.s32.totalorder %v152, %v154
    %v156 = vsel %vm155, %v150, 0.0
    %157 = vadd.xlane.f32.xlu0 %v156
    %v158 = vpop.xlane.xlu0 %157
    %v159 = vmul.f32 %v158, %v158
    %v160 = vsub.f32 1.0, %v159
    %v161 = vmax.f32 %v160, 0.0
    %v162 = vrsqrt.pop %v161
    %v163 = vmul.f32 %v161, %v162
    %vm164 = vcmp.eq.f32.partialorder %v161, inf
    %v165 = vsel %vm164, %v161, %v163
    %vm166 = vcmp.eq.f32.partialorder %v161, 0.0
    %v167 = vand.u32 %v161, 2147483648
    %v168 = vsel %vm166, %v167, %v165
    %v169 = vmul.f32 %v158, 0.87758255
    %v170 = vmul.f32 %v168, 0.47942555
    %v171 = vsub.f32 %v169, %v170
    %vm172 = vcmp.gt.f32.partialorder %v158, -0.87758255
    %v173 = vsub.f32 %v158, 0.23971277
    %v174 = vsel %vm172, %v171, %v173
    %vm175 = vcmask 7168
    %v176 = vsel %vm175, %v158, 0.0
    %177 = vadd.xlane.f32.xlu0 %v176
    %v178 = vpop.xlane.xlu0 %177
    %v179 = vrot.slane %v178, 4
    %v180 = vadd.f32 %v178, %v179
    %v181 = vrot.slane %v180, 2
    %v182 = vadd.f32 %v180, %v181
    %v183 = vrot.slane %v182, 1
    %v184 = vadd.f32 %v182, %v183
    %s185 = vtos %v184
    %v186 = vrcp.pop 8.0
    %s187 = vtos %v186
    %s188 = smul.f32 %s185, %s187
    %s189 = smul.f32 %s188, 0.01
    %s190 = sld [smem:[#allocation2]]
    %s191 = smul.f32 %s190, 0.99
    %s192 = sadd.f32 %s189, %s191
    %193 = vst.msk [vmem:[#allocation9] sm:$0xff] %vm53, %v59
    %194 = vst.msk [vmem:[%s4] sm:$0xff] %vm175, %v171
    %195 = vst.msk [vmem:[%s5] sm:$0xff] %vm175, %v174
    %s196 = scalar_lea.smem [#allocation10], 0
    %197 = sst [smem:[%s196]] %s192
    // Predicated region
    $region22: #{tpu_custom_call.1} parent=1 // pred_check
      _
    $region23: #{tpu_custom_call.1} parent=1 // pred_check_branch
      %199 = sbr.rel (0) target = $region25
    $region24: #{tpu_custom_call.1} parent=1 // pred_region
      %s201 = ssub.s32 128, 128
      %202 = vsyncadd [#allocation5], %s201
      %s204 = sshll.u32 [#allocation9], 4
      %s205 = int_to_ptr.vmem [resolvable:$true] %s204
      %207 = dma.vmem_to_hbm [thread:$0]  %s205, 128, %s3, [#allocation5]
    $region25: #{tpu_custom_call.1} parent=1 // pred_fallthru
      _
    // Predicated region
    $region26: #{tpu_custom_call.1} parent=1 // pred_check
      _
    $region27: #{tpu_custom_call.1} parent=1 // pred_check_branch
      %209 = sbr.rel (0) target = $region29
    $region28: #{tpu_custom_call.1} parent=1 // pred_region
      _
    $region29: #{tpu_custom_call.1} parent=1 // pred_fallthru
      _
    // Predicated region
    $region30: #{tpu_custom_call.1} parent=1 // pred_check
      _
    $region31: #{tpu_custom_call.1} parent=1 // pred_check_branch
      %211 = sbr.rel (0) target = $region33
    $region32: #{tpu_custom_call.1} parent=1 // pred_region
      _
    $region33: #{tpu_custom_call.1} parent=1 // pred_fallthru
      _
    // Predicated region
    $region34: #{tpu_custom_call.1} parent=1 // pred_check
      _
    $region35: #{tpu_custom_call.1} parent=1 // pred_check_branch
      %213 = sbr.rel (0) target = $region37
    $region36: #{tpu_custom_call.1} parent=1 // pred_region
      %s215 = ssub.s32 16, 16
      %216 = vsyncadd [#allocation6], %s215
      %219 = dma.smem_to_hbm [#allocation10], 16, %s6, [#allocation6]
    $region37: #{tpu_custom_call.1} parent=1 // pred_fallthru
      _
    // Predicated region
    $region38: #{tpu_custom_call.1} parent=1 // pred_check
      _
    $region39: #{tpu_custom_call.1} parent=1 // pred_check_branch
      %221 = sbr.rel (0) target = $region41
    $region40: #{tpu_custom_call.1} parent=1 // pred_region
      %222 = dma.done [#allocation5], 128
    $region41: #{tpu_custom_call.1} parent=1 // pred_fallthru
      _
    // Predicated region
    $region42: #{tpu_custom_call.1} parent=1 // pred_check
      _
    $region43: #{tpu_custom_call.1} parent=1 // pred_check_branch
      %224 = sbr.rel (0) target = $region45
    $region44: #{tpu_custom_call.1} parent=1 // pred_region
      _
    $region45: #{tpu_custom_call.1} parent=1 // pred_fallthru
      _
    // Predicated region
    $region46: #{tpu_custom_call.1} parent=1 // pred_check
      _
    $region47: #{tpu_custom_call.1} parent=1 // pred_check_branch
      %226 = sbr.rel (0) target = $region49
    $region48: #{tpu_custom_call.1} parent=1 // pred_region
      _
    $region49: #{tpu_custom_call.1} parent=1 // pred_fallthru
      _
    // Predicated region
    $region50: #{tpu_custom_call.1} parent=1 // pred_check
      _
    $region51: #{tpu_custom_call.1} parent=1 // pred_check_branch
      %228 = sbr.rel (0) target = $region53
    $region52: #{tpu_custom_call.1} parent=1 // pred_region
      %229 = dma.done [#allocation6], 16
    $region53: #{tpu_custom_call.1} parent=1 // pred_fallthru
      _
    %230 = sfence
    %231 = vsyncpa [#allocation4], 1
    %232 = vsyncpa [#allocation8], 1
    %233 = vsyncpa [#allocation5], 1
    %234 = vsyncpa [#allocation6], 1

</llo_original>
